<compile_context>
chip_gen: v6e
topology: v6e:2x2x1
jax: 0.10.0
libtpu: 0.0.40
codegen_flags: <defaults>
</compile_context>

<pallas_src>
import functools

import jax
import jax.numpy as jnp
from jax.experimental import pallas as pl
from jax.experimental.pallas import tpu as pltpu

SELU_ALPHA = 1.6732632423543772
SELU_SCALE = 1.0507009873554805

_SUBLANE = 8


def _round_up(n, m):
    return ((n + m - 1) // m) * m


def _selu(x):
    # jnp.where is select-only: the exp in the untaken branch never mixes in.
    return SELU_SCALE * jnp.where(x > 0, x, SELU_ALPHA * (jnp.exp(x) - 1.0))


def _vae_kernel(x_ref, eps_ref, w1_ref, b1_ref, w2_ref, b2_ref,
                z_ref, mu_ref, lv_ref, *, latent_dim):
    # Fused first layer: columns [0:2L] = mu hidden, [2L:4L] = logvar hidden.
    h = _selu(
        jnp.dot(x_ref[...], w1_ref[...], preferred_element_type=jnp.float32)
        + b1_ref[...]
    )

    # Fused block-diagonal second layer: columns [0:L] = mu, [L:2L] = logvar.
    y = (jnp.dot(h, w2_ref[...], preferred_element_type=jnp.float32)
         + b2_ref[...])
    mu = y[:, :latent_dim]
    logvar = y[:, latent_dim:]

    # Reparameterization: z = mu + eps * exp(0.5 * logvar)   (EUP slot, f32).
    z = mu + eps_ref[...].astype(jnp.float32) * jnp.exp(0.5 * logvar)

    z_ref[...] = z.astype(z_ref.dtype)
    mu_ref[...] = mu.astype(mu_ref.dtype)
    lv_ref[...] = logvar.astype(lv_ref.dtype)


def pack_params(params, in_features, latent_dim, dtype=jnp.float32):
    """Fuse the two heads into two compact weight slabs (no lane padding).

    Use dtype=jnp.bfloat16 on v6e/v7x to halve the x/weight HBM bytes
    (accumulation stays f32 in the kernel; loosen test tolerances to ~1e-2).
    """
    L = latent_dim
    H = 4 * L  # fused hidden: [mu 2L | logvar 2L]

    w1 = jnp.concatenate([params["w1_mu"], params["w1_lv"]], axis=1)   # (F, 4L)
    b1 = jnp.concatenate([params["b1_mu"], params["b1_lv"]], axis=1)   # (1, 4L)

    # Block-diagonal second layer so one matmul yields [mu | logvar].
    w2 = jnp.zeros((H, 2 * L), jnp.float32)
    w2 = w2.at[:2 * L, :L].set(params["w2_mu"])
    w2 = w2.at[2 * L:, L:].set(params["w2_lv"])                        # (4L, 2L)
    b2 = jnp.concatenate([params["b2_mu"], params["b2_lv"]], axis=1)   # (1, 2L)

    return {
        "w1": w1.astype(dtype), "b1": b1.astype(jnp.float32),
        "w2": w2.astype(dtype), "b2": b2.astype(jnp.float32),
        "in_features": in_features, "latent_dim": L,
    }


def _choose_tb(batch, tb_max, min_grid_steps):
    """Batch tile: multiple of 8, <= tb_max, >= enough steps for megacore."""
    b8 = _round_up(batch, _SUBLANE)
    tb = _round_up(pl.cdiv(b8, min_grid_steps), _SUBLANE)
    return max(_SUBLANE, min(tb, tb_max, b8))


def vae_mu_logvar_forward(x, packed, eps, *, tb_max=1024, min_grid_steps=4):
    """Runs the fused Pallas kernel. Returns (z, mu, logvar)."""
    B, F = x.shape
    L = packed["latent_dim"]
    assert F == packed["in_features"]
    assert eps.shape == (B, L)

    TB = _choose_tb(B, tb_max, min_grid_steps)
    grid = (pl.cdiv(B, TB),)

    in_dtype = packed["w1"].dtype
    x = x.astype(in_dtype)
    itemsize = jnp.dtype(in_dtype).itemsize

    cost = pl.CostEstimate(
        flops=2 * B * (F * 4 * L + 8 * L * L),
        transcendentals=B * 5 * L,
        bytes_accessed=(B * F * itemsize            # x
                        + B * L * 4                 # eps
                        + (F * 4 * L + 8 * L * L) * itemsize + 6 * L * 4  # params
                        + 3 * B * L * 4),           # z, mu, logvar
    )

    kernel = functools.partial(_vae_kernel, latent_dim=L)

    z, mu, logvar = pl.pallas_call(
        kernel,
        out_shape=(
            jax.ShapeDtypeStruct((B, L), jnp.float32),
            jax.ShapeDtypeStruct((B, L), jnp.float32),
            jax.ShapeDtypeStruct((B, L), jnp.float32),
        ),
        grid_spec=pltpu.PrefetchScalarGridSpec(
            num_scalar_prefetch=0,
            grid=grid,
            in_specs=[
                pl.BlockSpec((TB, F), lambda i: (i, 0)),          # x (unpadded)
                pl.BlockSpec((TB, L), lambda i: (i, 0)),          # eps (unpadded)
                pl.BlockSpec((F, 4 * L), lambda i: (0, 0)),       # fused W1 (resident)
                pl.BlockSpec((1, 4 * L), lambda i: (0, 0)),       # fused b1
                pl.BlockSpec((4 * L, 2 * L), lambda i: (0, 0)),   # fused W2
                pl.BlockSpec((1, 2 * L), lambda i: (0, 0)),       # fused b2
            ],
            out_specs=[
                pl.BlockSpec((TB, L), lambda i: (i, 0)),          # z
                pl.BlockSpec((TB, L), lambda i: (i, 0)),          # mu
                pl.BlockSpec((TB, L), lambda i: (i, 0)),          # logvar
            ],
        ),
        compiler_params=pltpu.CompilerParams(
            dimension_semantics=("parallel",)),
        cost_estimate=cost,
    )(x, eps, packed["w1"], packed["b1"], packed["w2"], packed["b2"])

    return z, mu, logvar


def init_params(key, in_features, latent_dim):
    """Deterministic synthetic parameters (weights stored as [in, out])."""
    hidden = 2 * latent_dim
    keys = jax.random.split(key, 8)

    def lin(kw, kb, fan_in, fan_out):
        bound = 1.0 / jnp.sqrt(jnp.float32(fan_in))
        w = jax.random.uniform(kw, (fan_in, fan_out), jnp.float32, -bound, bound)
        b = jax.random.uniform(kb, (1, fan_out), jnp.float32, -bound, bound)
        return w, b

    w1m, b1m = lin(keys[0], keys[1], in_features, hidden)
    w2m, b2m = lin(keys[2], keys[3], hidden, latent_dim)
    w1v, b1v = lin(keys[4], keys[5], in_features, hidden)
    w2v, b2v = lin(keys[6], keys[7], hidden, latent_dim)
    return {
        "w1_mu": w1m, "b1_mu": b1m, "w2_mu": w2m, "b2_mu": b2m,
        "w1_lv": w1v, "b1_lv": b1v, "w2_lv": w2v, "b2_lv": b2v,
    }


def reference_forward(x, params, eps):
    """Pure-JAX reference for correctness check (un-fused)."""
    h_mu = _selu(x @ params["w1_mu"] + params["b1_mu"])
    mu = h_mu @ params["w2_mu"] + params["b2_mu"]
    h_lv = _selu(x @ params["w1_lv"] + params["b1_lv"])
    logvar = h_lv @ params["w2_lv"] + params["b2_lv"]
    z = mu + eps * jnp.exp(0.5 * logvar)
    return z, mu, logvar


if __name__ == "__main__":
    key = jax.random.PRNGKey(0)
    k_param, k_x, k_eps = jax.random.split(key, 3)

    batch = 8
    in_features = 32
    latent_dim = 16

    params = init_params(k_param, in_features, latent_dim)
    packed = pack_params(params, in_features, latent_dim)  # dtype=jnp.bfloat16 on v6e/v7x

    x = jax.random.normal(k_x, (batch, in_features), jnp.float32)
    # TODO(synk): torch.randn-inside-forward could be generated in-kernel via
    # pltpu.prng_seed + pltpu.stateful_normal (seed via scalar prefetch) to
    # delete the eps HBM read; kept as an explicit input here so the result is
    # deterministically checkable against the pure-JAX reference.
    eps = jax.random.normal(k_eps, (batch, latent_dim), jnp.float32)

    z, mu, logvar = vae_mu_logvar_forward(x, packed, eps)
    jax.block_until_ready((z, mu, logvar))

    z_ref, mu_ref, lv_ref = reference_forward(x, params, eps)
    assert jnp.allclose(z, z_ref, atol=1e-5, rtol=1e-5)
    assert jnp.allclose(mu, mu_ref, atol=1e-5, rtol=1e-5)
    assert jnp.allclose(logvar, lv_ref, atol=1e-5, rtol=1e-5)

    print("KERNEL_OK")
</pallas_src>

<mosaic_0001>
module attributes {stable_mosaic.version = 11 : i64} {
  func.func @_vae_kernel(%arg0: i32, %arg1: memref<8x32xf32, #tpu.memory_space<vmem>>, %arg2: memref<8x16xf32, #tpu.memory_space<vmem>>, %arg3: memref<32x64xf32, #tpu.memory_space<vmem>>, %arg4: memref<1x64xf32, #tpu.memory_space<vmem>>, %arg5: memref<64x32xf32, #tpu.memory_space<vmem>>, %arg6: memref<1x32xf32, #tpu.memory_space<vmem>>, %arg7: memref<8x16xf32, #tpu.memory_space<vmem>>, %arg8: memref<8x16xf32, #tpu.memory_space<vmem>>, %arg9: memref<8x16xf32, #tpu.memory_space<vmem>>) attributes {dimension_semantics = [#tpu.dimension_semantics<parallel>], iteration_bounds = array<i64: 1>, scalar_prefetch = 0 : i64, scratch_operands = 0 : i64, tpu.core_type = #tpu.core_type<tc>, window_params = [{transform_indices = @transform_0, window_bounds = array<i64: 8, 32>}, {transform_indices = @transform_1, window_bounds = array<i64: 8, 16>}, {pipeline_mode = #tpu.pipeline_mode<synchronous>, transform_indices = @transform_2, window_bounds = array<i64: 32, 64>}, {pipeline_mode = #tpu.pipeline_mode<synchronous>, transform_indices = @transform_3, window_bounds = array<i64: 1, 64>}, {pipeline_mode = #tpu.pipeline_mode<synchronous>, transform_indices = @transform_4, window_bounds = array<i64: 64, 32>}, {pipeline_mode = #tpu.pipeline_mode<synchronous>, transform_indices = @transform_5, window_bounds = array<i64: 1, 32>}, {transform_indices = @transform_6, window_bounds = array<i64: 8, 16>}, {transform_indices = @transform_7, window_bounds = array<i64: 8, 16>}, {transform_indices = @transform_8, window_bounds = array<i64: 8, 16>}]} {
    %c0 = arith.constant 0 : index
    %c0_0 = arith.constant 0 : index
    %0 = vector.load %arg1[%c0, %c0_0] : memref<8x32xf32, #tpu.memory_space<vmem>>, vector<8x32xf32>
    %c0_1 = arith.constant 0 : index
    %c0_2 = arith.constant 0 : index
    %1 = vector.load %arg3[%c0_1, %c0_2] : memref<32x64xf32, #tpu.memory_space<vmem>>, vector<32x64xf32>
    %cst = arith.constant dense<0.000000e+00> : vector<8x64xf32>
    %2 = tpu.matmul %0, %1, %cst {dimension_numbers = #tpu.dot_dimension_numbers<[1], [0], [0], [1], [0, 0, 1, 1], [], []>} : vector<8x32xf32>, vector<32x64xf32>, vector<8x64xf32> -> vector<8x64xf32>
    %c0_3 = arith.constant 0 : index
    %c0_4 = arith.constant 0 : index
    %3 = vector.load %arg4[%c0_3, %c0_4] : memref<1x64xf32, #tpu.memory_space<vmem>>, vector<1x64xf32>
    %4 = vector.broadcast %3 : vector<1x64xf32> to vector<8x64xf32>
    %5 = arith.addf %2, %4 : vector<8x64xf32>
    %cst_5 = arith.constant 0.000000e+00 : f32
    %6 = vector.broadcast %cst_5 : f32 to vector<8x64xf32>
    %7 = arith.cmpf ogt, %5, %6 : vector<8x64xf32>
    %8 = math.exp %5 : vector<8x64xf32>
    %cst_6 = arith.constant 1.000000e+00 : f32
    %9 = vector.broadcast %cst_6 : f32 to vector<8x64xf32>
    %10 = arith.subf %8, %9 : vector<8x64xf32>
    %cst_7 = arith.constant 1.67326319 : f32
    %11 = vector.broadcast %cst_7 : f32 to vector<8x64xf32>
    %12 = arith.mulf %11, %10 : vector<8x64xf32>
    %13 = arith.select %7, %5, %12 : vector<8x64xi1>, vector<8x64xf32>
    %cst_8 = arith.constant 1.05070102 : f32
    %14 = vector.broadcast %cst_8 : f32 to vector<8x64xf32>
    %15 = arith.mulf %14, %13 : vector<8x64xf32>
    %c0_9 = arith.constant 0 : index
    %c0_10 = arith.constant 0 : index
    %16 = vector.load %arg5[%c0_9, %c0_10] : memref<64x32xf32, #tpu.memory_space<vmem>>, vector<64x32xf32>
    %cst_11 = arith.constant dense<0.000000e+00> : vector<8x32xf32>
    %17 = tpu.matmul %15, %16, %cst_11 {dimension_numbers = #tpu.dot_dimension_numbers<[1], [0], [0], [1], [0, 0, 1, 1], [], []>} : vector<8x64xf32>, vector<64x32xf32>, vector<8x32xf32> -> vector<8x32xf32>
    %c0_12 = arith.constant 0 : index
    %c0_13 = arith.constant 0 : index
    %18 = vector.load %arg6[%c0_12, %c0_13] : memref<1x32xf32, #tpu.memory_space<vmem>>, vector<1x32xf32>
    %19 = vector.broadcast %18 : vector<1x32xf32> to vector<8x32xf32>
    %20 = arith.addf %17, %19 : vector<8x32xf32>
    %21 = vector.extract_strided_slice %20 {offsets = [0, 0], sizes = [8, 16], strides = [1, 1]} : vector<8x32xf32> to vector<8x16xf32>
    %22 = vector.extract_strided_slice %20 {offsets = [0, 16], sizes = [8, 16], strides = [1, 1]} : vector<8x32xf32> to vector<8x16xf32>
    %c0_14 = arith.constant 0 : index
    %c0_15 = arith.constant 0 : index
    %23 = vector.load %arg2[%c0_14, %c0_15] : memref<8x16xf32, #tpu.memory_space<vmem>>, vector<8x16xf32>
    %cst_16 = arith.constant 5.000000e-01 : f32
    %24 = vector.broadcast %cst_16 : f32 to vector<8x16xf32>
    %25 = arith.mulf %24, %22 : vector<8x16xf32>
    %26 = math.exp %25 : vector<8x16xf32>
    %27 = arith.mulf %23, %26 : vector<8x16xf32>
    %28 = arith.addf %21, %27 : vector<8x16xf32>
    %c0_17 = arith.constant 0 : index
    %c0_18 = arith.constant 0 : index
    %29 = vector.load %arg7[%c0_17, %c0_18] : memref<8x16xf32, #tpu.memory_space<vmem>>, vector<8x16xf32>
    tpu.vector_store %arg7[%c0_17, %c0_18], %28 {strides = array<i32>} : memref<8x16xf32, #tpu.memory_space<vmem>>, vector<8x16xf32>,
    %c0_19 = arith.constant 0 : index
    %c0_20 = arith.constant 0 : index
    %30 = vector.load %arg8[%c0_19, %c0_20] : memref<8x16xf32, #tpu.memory_space<vmem>>, vector<8x16xf32>
    tpu.vector_store %arg8[%c0_19, %c0_20], %21 {strides = array<i32>} : memref<8x16xf32, #tpu.memory_space<vmem>>, vector<8x16xf32>,
    %c0_21 = arith.constant 0 : index
    %c0_22 = arith.constant 0 : index
    %31 = vector.load %arg9[%c0_21, %c0_22] : memref<8x16xf32, #tpu.memory_space<vmem>>, vector<8x16xf32>
    tpu.vector_store %arg9[%c0_21, %c0_22], %22 {strides = array<i32>} : memref<8x16xf32, #tpu.memory_space<vmem>>, vector<8x16xf32>,
    return
  }
  func.func @transform_0(%arg0: i32) -> (i32, i32) {
    %c0_i32 = arith.constant 0 : i32
    %c0_i32_0 = arith.constant 0 : i32
    return %arg0, %c0_i32 : i32, i32
  }
  func.func @transform_1(%arg0: i32) -> (i32, i32) {
    %c0_i32 = arith.constant 0 : i32
    %c0_i32_0 = arith.constant 0 : i32
    return %arg0, %c0_i32 : i32, i32
  }
  func.func @transform_2(%arg0: i32) -> (i32, i32) {
    %c0_i32 = arith.constant 0 : i32
    %c0_i32_0 = arith.constant 0 : i32
    %c0_i32_1 = arith.constant 0 : i32
    return %c0_i32, %c0_i32_0 : i32, i32
  }
  func.func @transform_3(%arg0: i32) -> (i32, i32) {
    %c0_i32 = arith.constant 0 : i32
    %c0_i32_0 = arith.constant 0 : i32
    %c0_i32_1 = arith.constant 0 : i32
    return %c0_i32, %c0_i32_0 : i32, i32
  }
  func.func @transform_4(%arg0: i32) -> (i32, i32) {
    %c0_i32 = arith.constant 0 : i32
    %c0_i32_0 = arith.constant 0 : i32
    %c0_i32_1 = arith.constant 0 : i32
    return %c0_i32, %c0_i32_0 : i32, i32
  }
  func.func @transform_5(%arg0: i32) -> (i32, i32) {
    %c0_i32 = arith.constant 0 : i32
    %c0_i32_0 = arith.constant 0 : i32
    %c0_i32_1 = arith.constant 0 : i32
    return %c0_i32, %c0_i32_0 : i32, i32
  }
  func.func @transform_6(%arg0: i32) -> (i32, i32) {
    %c0_i32 = arith.constant 0 : i32
    %c0_i32_0 = arith.constant 0 : i32
    return %arg0, %c0_i32 : i32, i32
  }
  func.func @transform_7(%arg0: i32) -> (i32, i32) {
    %c0_i32 = arith.constant 0 : i32
    %c0_i32_0 = arith.constant 0 : i32
    return %arg0, %c0_i32 : i32, i32
  }
  func.func @transform_8(%arg0: i32) -> (i32, i32) {
    %c0_i32 = arith.constant 0 : i32
    %c0_i32_0 = arith.constant 0 : i32
    return %arg0, %c0_i32 : i32, i32
  }
}

</mosaic_0001>

<llo_original>
// kernel: tpu_custom_call.1
$region0: #{tpu_custom_call.1}
  #allocation0 [shape = 'u32[]', space=smem, size = 0x4, offset = 0x4, fixed_abs, tag = 'smem constant byte address 0x4 - core index']
  #allocation1 [shape = 'u32[144,128]{1,0:T(1,128)}', space=vmem, size = 0x12000, scoped, tag = 'internal scratch']
  %s0 = inlined_call_operand.vmem [shape: f32[8,32], index: 0, kind: input, shape index: {}]
  %s1 = inlined_call_operand.vmem [shape: f32[8,16], index: 1, kind: input, shape index: {}]
  %s2 = inlined_call_operand.vmem [shape: f32[32,64], index: 2, kind: input, shape index: {}]
  %s3 = inlined_call_operand.vmem [shape: f32[1,64], index: 3, kind: input, shape index: {}]
  %s4 = inlined_call_operand.vmem [shape: f32[64,32], index: 4, kind: input, shape index: {}]
  %s5 = inlined_call_operand.vmem [shape: f32[1,32], index: 5, kind: input, shape index: {}]
  %s6 = inlined_call_operand.hbm [shape: f32[8,16], index: 6, kind: output, shape index: {0}]
  %s7 = inlined_call_operand.hbm [shape: f32[8,16], index: 7, kind: output, shape index: {1}]
  %s8 = inlined_call_operand.hbm [shape: f32[8,16], index: 8, kind: output, shape index: {2}]
  %9 = xla_tuple %s6, %s7, %s8
  %s10 = sld [smem:[#allocation0]]
  $region50: #{tpu_custom_call.1} parent=0
    _
  %s12 = ssub.s32 1, %s10
  %s13 = scalar_select 0, %s12, %s10
  $region1: #{tpu_custom_call.1} parent=0
    #allocation2 [shape = 'u8[4096]{0}', space=vmem, size = 0x1000, scoped, tag = 'output window, operand 0, single buffered']
    #allocation3 [shape = 's32[1]{0}', space=sflag, size = 0x4, scoped, tag = 'scoped memory for tpu_custom_call.1']
    #allocation4 [shape = 'u8[4096]{0}', space=vmem, size = 0x1000, scoped, tag = 'output window, operand 1, single buffered']
    #allocation5 [shape = 's32[1]{0}', space=sflag, size = 0x4, scoped, tag = 'scoped memory for tpu_custom_call.1']
    #allocation6 [shape = 'u8[4096]{0}', space=vmem, size = 0x1000, scoped, tag = 'output window, operand 2, single buffered']
    %14 = vsyncpa [#allocation3], 0
    %15 = vsyncpa [#allocation5], 0
    // Predicated region
    $region2: #{tpu_custom_call.1} parent=1 // pred_check
      _
    $region3: #{tpu_custom_call.1} parent=1 // pred_check_branch
      %17 = sbr.rel (0) target = $region5
    $region4: #{tpu_custom_call.1} parent=1 // pred_region
      _
    $region5: #{tpu_custom_call.1} parent=1 // pred_fallthru
      _
    // Predicated region
    $region6: #{tpu_custom_call.1} parent=1 // pred_check
      _
    $region7: #{tpu_custom_call.1} parent=1 // pred_check_branch
      %19 = sbr.rel (0) target = $region9
    $region8: #{tpu_custom_call.1} parent=1 // pred_region
      _
    $region9: #{tpu_custom_call.1} parent=1 // pred_fallthru
      _
    // Predicated region
    $region10: #{tpu_custom_call.1} parent=1 // pred_check
      _
    $region11: #{tpu_custom_call.1} parent=1 // pred_check_branch
      %21 = sbr.rel (0) target = $region13
    $region12: #{tpu_custom_call.1} parent=1 // pred_region
      _
    $region13: #{tpu_custom_call.1} parent=1 // pred_fallthru
      _
    // Predicated region
    $region14: #{tpu_custom_call.1} parent=1 // pred_check
      _
    $region15: #{tpu_custom_call.1} parent=1 // pred_check_branch
      %23 = sbr.rel (0) target = $region17
    $region16: #{tpu_custom_call.1} parent=1 // pred_region
      _
    $region17: #{tpu_custom_call.1} parent=1 // pred_fallthru
      _
    // Predicated region
    $region18: #{tpu_custom_call.1} parent=1 // pred_check
      _
    $region19: #{tpu_custom_call.1} parent=1 // pred_check_branch
      %25 = sbr.rel (0) target = $region21
    $region20: #{tpu_custom_call.1} parent=1 // pred_region
      _
    $region21: #{tpu_custom_call.1} parent=1 // pred_fallthru
      _
    // Predicated region
    $region22: #{tpu_custom_call.1} parent=1 // pred_check
      _
    $region23: #{tpu_custom_call.1} parent=1 // pred_check_branch
      %27 = sbr.rel (0) target = $region25
    $region24: #{tpu_custom_call.1} parent=1 // pred_region
      _
    $region25: #{tpu_custom_call.1} parent=1 // pred_fallthru
      _
    %v28 = vld [vmem:[%s0] sm:$0xff]
    %v29 = vld [vmem:[%s2] sm:$0xff]
    %v30 = vld [vmem:[%s2 + $0x8] sm:$0xff]
    %v31 = vld [vmem:[%s2 + $0x10] sm:$0xff]
    %v32 = vld [vmem:[%s2 + $0x18] sm:$0xff]
    %v33 = vld [vmem:[%s3] sm:$0x1]
    %v35 = vlaneseq
    %v36 = vshrl.u32 %v35, 7
    %v37 = vsub.s32 0, %v36
    %v38 = vrot.slane %v33, %v37
    %vm40 = vcmask 261120
    %v42 = vsel %vm40, %v28, 0
    %44 = vmatprep.subr.mxu0 0.0
    %45 = vmatpush1.msra.mxu0 0.0
    %46 = vmatprep.subr.mxu0 0.0
    %47 = vmatpush1.msra.mxu0 0.0
    %48 = vmatprep.subr.mxu0 0.0
    %49 = vmatpush1.msra.mxu0 0.0
    %50 = vmatprep.subr.mxu0 0.0
    %51 = vmatpush1.msra.mxu0 0.0
    %52 = vmatprep.subr.mxu0 0.0
    %53 = vmatpush1.msra.mxu0 0.0
    %54 = vmatprep.subr.mxu0 0.0
    %55 = vmatpush1.msra.mxu0 0.0
    %56 = vmatprep.subr.mxu0 0.0
    %57 = vmatpush1.msra.mxu0 0.0
    %58 = vmatprep.subr.mxu0 0.0
    %59 = vmatpush1.msra.mxu0 0.0
    %60 = vmatprep.subr.mxu0 0.0
    %61 = vmatpush1.msra.mxu0 0.0
    %62 = vmatprep.subr.mxu0 0.0
    %63 = vmatpush1.msra.mxu0 0.0
    %64 = vmatprep.subr.mxu0 0.0
    %65 = vmatpush1.msra.mxu0 0.0
    %66 = vmatprep.subr.mxu0 0.0
    %67 = vmatpush1.msra.mxu0 0.0
    %68 = vmatprep.subr.mxu0 0.0
    %69 = vmatpush1.msra.mxu0 %v32
    %70 = vmatprep.subr.mxu0 0.0
    %71 = vmatpush1.msra.mxu0 %v31
    %72 = vmatprep.subr.mxu0 0.0
    %73 = vmatpush1.msra.mxu0 %v30
    %74 = vmatprep.subr.mxu0 0.0
    %75 = vmatpush1.msra.mxu0 %v29
    %76 = vmatprep.subr.mxu0 0.0
    %77 = vmatpush2.msra.mxu0 0.0
    %78 = vmatprep.subr.mxu0 0.0
    %79 = vmatpush2.msra.mxu0 0.0
    %80 = vmatprep.subr.mxu0 0.0
    %81 = vmatpush2.msra.mxu0 0.0
    %82 = vmatprep.subr.mxu0 0.0
    %83 = vmatpush2.msra.mxu0 0.0
    %84 = vmatprep.subr.mxu0 0.0
    %85 = vmatpush2.msra.mxu0 0.0
    %86 = vmatprep.subr.mxu0 0.0
    %87 = vmatpush2.msra.mxu0 0.0
    %88 = vmatprep.subr.mxu0 0.0
    %89 = vmatpush2.msra.mxu0 0.0
    %90 = vmatprep.subr.mxu0 0.0
    %91 = vmatpush2.msra.mxu0 0.0
    %92 = vmatprep.subr.mxu0 0.0
    %93 = vmatpush2.msra.mxu0 0.0
    %94 = vmatprep.subr.mxu0 0.0
    %95 = vmatpush2.msra.mxu0 0.0
    %96 = vmatprep.subr.mxu0 0.0
    %97 = vmatpush2.msra.mxu0 0.0
    %98 = vmatprep.subr.mxu0 0.0
    %99 = vmatpush2.msra.mxu0 0.0
    %100 = vmatprep.subr.mxu0 0.0
    %101 = vmatpush2.msra.mxu0 0.0
    %102 = vmatprep.subr.mxu0 0.0
    %103 = vmatpush2.msra.mxu0 0.0
    %104 = vmatprep.subr.mxu0 0.0
    %105 = vmatpush2.msra.mxu0 0.0
    %106 = vmatprep.subr.mxu0 0.0
    %107 = vmatpush2.msra.mxu0 0.0
    %108 = vmatprep.mubr.f32.mxu0 0.0
    %109 = vmatmul.mubr.f32.gmra.mxu0 %v42
    %v110 = vpop.f32.mrf.mxu0
    %v111 = vadd.f32 %v38, %v110
    %v112 = vpop.f32.mrf.mxu0
    %113 = vdwg.mxu0
    %vm114 = vcmp.gt.f32.partialorder %v111, 0.0
    %v115 = vmul.f32 %v111, 1.442695
    %v116 = vpow.pop %v115
    %v117 = vsub.f32 %v116, 1.0
    %v118 = vmul.f32 %v117, 1.6732632
    %v119 = vsel %vm114, %v111, %v118
    %v120 = vmul.f32 %v119, 1.050701
    %v121 = vld [vmem:[%s4] sm:$0xff]
    %v122 = vld [vmem:[%s4 + $0x8] sm:$0xff]
    %v123 = vld [vmem:[%s4 + $0x10] sm:$0xff]
    %v124 = vld [vmem:[%s4 + $0x18] sm:$0xff]
    %v125 = vld [vmem:[%s4 + $0x20] sm:$0xff]
    %v126 = vld [vmem:[%s4 + $0x28] sm:$0xff]
    %v127 = vld [vmem:[%s4 + $0x30] sm:$0xff]
    %v128 = vld [vmem:[%s4 + $0x38] sm:$0xff]
    %v129 = vld [vmem:[%s5] sm:$0x1]
    %v131 = vlaneseq
    %v132 = vshrl.u32 %v131, 7
    %v133 = vsub.s32 0, %v132
    %v134 = vrot.slane %v129, %v133
    %vm136 = vcmask 523264
    %v138 = vsel %vm136, %v120, 0
    %140 = vmatprep.subr.mxu0 0.0
    %141 = vmatpush1.msra.mxu0 0.0
    %142 = vmatprep.subr.mxu0 0.0
    %143 = vmatpush1.msra.mxu0 0.0
    %144 = vmatprep.subr.mxu0 0.0
    %145 = vmatpush1.msra.mxu0 0.0
    %146 = vmatprep.subr.mxu0 0.0
    %147 = vmatpush1.msra.mxu0 0.0
    %148 = vmatprep.subr.mxu0 0.0
    %149 = vmatpush1.msra.mxu0 0.0
    %150 = vmatprep.subr.mxu0 0.0
    %151 = vmatpush1.msra.mxu0 0.0
    %152 = vmatprep.subr.mxu0 0.0
    %153 = vmatpush1.msra.mxu0 0.0
    %154 = vmatprep.subr.mxu0 0.0
    %155 = vmatpush1.msra.mxu0 0.0
    %156 = vmatprep.subr.mxu0 0.0
    %157 = vmatpush1.msra.mxu0 %v128
    %158 = vmatprep.subr.mxu0 0.0
    %159 = vmatpush1.msra.mxu0 %v127
    %160 = vmatprep.subr.mxu0 0.0
    %161 = vmatpush1.msra.mxu0 %v126
    %162 = vmatprep.subr.mxu0 0.0
    %163 = vmatpush1.msra.mxu0 %v125
    %164 = vmatprep.subr.mxu0 0.0
    %165 = vmatpush1.msra.mxu0 %v124
    %166 = vmatprep.subr.mxu0 0.0
    %167 = vmatpush1.msra.mxu0 %v123
    %168 = vmatprep.subr.mxu0 0.0
    %169 = vmatpush1.msra.mxu0 %v122
    %170 = vmatprep.subr.mxu0 0.0
    %171 = vmatpush1.msra.mxu0 %v121
    %172 = vmatprep.subr.mxu0 0.0
    %173 = vmatpush2.msra.mxu0 0.0
    %174 = vmatprep.subr.mxu0 0.0
    %175 = vmatpush2.msra.mxu0 0.0
    %176 = vmatprep.subr.mxu0 0.0
    %177 = vmatpush2.msra.mxu0 0.0
    %178 = vmatprep.subr.mxu0 0.0
    %179 = vmatpush2.msra.mxu0 0.0
    %180 = vmatprep.subr.mxu0 0.0
    %181 = vmatpush2.msra.mxu0 0.0
    %182 = vmatprep.subr.mxu0 0.0
    %183 = vmatpush2.msra.mxu0 0.0
    %184 = vmatprep.subr.mxu0 0.0
    %185 = vmatpush2.msra.mxu0 0.0
    %186 = vmatprep.subr.mxu0 0.0
    %187 = vmatpush2.msra.mxu0 0.0
    %188 = vmatprep.subr.mxu0 0.0
    %189 = vmatpush2.msra.mxu0 0.0
    %190 = vmatprep.subr.mxu0 0.0
    %191 = vmatpush2.msra.mxu0 0.0
    %192 = vmatprep.subr.mxu0 0.0
    %193 = vmatpush2.msra.mxu0 0.0
    %194 = vmatprep.subr.mxu0 0.0
    %195 = vmatpush2.msra.mxu0 0.0
    %196 = vmatprep.subr.mxu0 0.0
    %197 = vmatpush2.msra.mxu0 0.0
    %198 = vmatprep.subr.mxu0 0.0
    %199 = vmatpush2.msra.mxu0 0.0
    %200 = vmatprep.subr.mxu0 0.0
    %201 = vmatpush2.msra.mxu0 0.0
    %202 = vmatprep.subr.mxu0 0.0
    %203 = vmatpush2.msra.mxu0 0.0
    %204 = vmatprep.mubr.f32.mxu0 0.0
    %205 = vmatmul.mubr.f32.gmra.mxu0 %v138
    %v206 = vpop.f32.mrf.mxu0
    %v207 = vadd.f32 %v134, %v206
    %v208 = vpop.f32.mrf.mxu0
    %209 = vdwg.mxu0
    %v210 = vld [vmem:[%s1] sm:$0xff]
    %v211 = vmul.f32 %v207, 0.5
    %v212 = vmul.f32 %v211, 1.442695
    %v213 = vpow.pop %v212
    %215 = vrot.lane.b32.xlu0 %v213, 112
    %v216 = vpop.permute.xlu0 %215
    %v218 = vmul.f32 %v210, %v216
    %v219 = vadd.f32 %v207, %v218
    %vm220 = vcmask 130048
    %221 = vst.msk [vmem:[#allocation2] sm:$0xff] %vm220, %v219
    %222 = vst.msk [vmem:[#allocation4] sm:$0xff] %vm220, %v207
    %224 = vrot.lane.b32.xlu0 %v207, 112
    %v225 = vpop.permute.xlu0 %224
    %227 = vst.msk [vmem:[#allocation6] sm:$0xff] %vm220, %v225
    // Predicated region
    $region26: #{tpu_custom_call.1} parent=1 // pred_check
      _
    $region27: #{tpu_custom_call.1} parent=1 // pred_check_branch
      %229 = sbr.rel (0) target = $region29
    $region28: #{tpu_custom_call.1} parent=1 // pred_region
      %s231 = ssub.s32 128, 128
      %232 = vsyncadd [#allocation3], %s231
      %s234 = sshll.u32 [#allocation2], 4
      %s235 = int_to_ptr.vmem [resolvable:$true] %s234
      %237 = dma.vmem_to_hbm [thread:$0]  %s235, 128, %s6, [#allocation3]
    $region29: #{tpu_custom_call.1} parent=1 // pred_fallthru
      _
    // Predicated region
    $region30: #{tpu_custom_call.1} parent=1 // pred_check
      _
    $region31: #{tpu_custom_call.1} parent=1 // pred_check_branch
      %239 = sbr.rel (0) target = $region33
    $region32: #{tpu_custom_call.1} parent=1 // pred_region
      %s241 = ssub.s32 128, 128
      %242 = vsyncadd [#allocation5], %s241
      %s244 = sshll.u32 [#allocation4], 4
      %s245 = int_to_ptr.vmem [resolvable:$true] %s244
      %247 = dma.vmem_to_hbm [thread:$0]  %s245, 128, %s7, [#allocation5]
    $region33: #{tpu_custom_call.1} parent=1 // pred_fallthru
      _
    // Predicated region
    $region34: #{tpu_custom_call.1} parent=1 // pred_check
      _
    $region35: #{tpu_custom_call.1} parent=1 // pred_check_branch
      %249 = sbr.rel (0) target = $region37
    $region36: #{tpu_custom_call.1} parent=1 // pred_region
      %s251 = ssub.s32 128, 128
      %252 = vsyncadd [#allocation5], %s251
      %s254 = sshll.u32 [#allocation6], 4
      %s255 = int_to_ptr.vmem [resolvable:$true] %s254
      %257 = dma.vmem_to_hbm [thread:$0]  %s255, 128, %s8, [#allocation5]
    $region37: #{tpu_custom_call.1} parent=1 // pred_fallthru
      _
    // Predicated region
    $region38: #{tpu_custom_call.1} parent=1 // pred_check
      _
    $region39: #{tpu_custom_call.1} parent=1 // pred_check_branch
      %259 = sbr.rel (0) target = $region41
    $region40: #{tpu_custom_call.1} parent=1 // pred_region
      %260 = dma.done [#allocation3], 128
    $region41: #{tpu_custom_call.1} parent=1 // pred_fallthru
      _
    // Predicated region
    $region42: #{tpu_custom_call.1} parent=1 // pred_check
      _
    $region43: #{tpu_custom_call.1} parent=1 // pred_check_branch
      %262 = sbr.rel (0) target = $region45
    $region44: #{tpu_custom_call.1} parent=1 // pred_region
      %263 = dma.done [#allocation5], 128
    $region45: #{tpu_custom_call.1} parent=1 // pred_fallthru
      _
    // Predicated region
    $region46: #{tpu_custom_call.1} parent=1 // pred_check
      _
    $region47: #{tpu_custom_call.1} parent=1 // pred_check_branch
      %265 = sbr.rel (0) target = $region49
    $region48: #{tpu_custom_call.1} parent=1 // pred_region
      %266 = dma.done [#allocation5], 128
    $region49: #{tpu_custom_call.1} parent=1 // pred_fallthru
      _
    %267 = vsyncpa [#allocation3], 1
    %268 = vsyncpa [#allocation5], 1

</llo_original>
